<compile_context>
chip_gen: v5e
topology: v5e:2x2
jax: 0.10.0
libtpu: 0.0.40
codegen_flags: <defaults>
</compile_context>

<pallas_src>
import functools

import jax
import jax.numpy as jnp
from jax import lax
from jax.experimental import pallas as pl
from jax.experimental.pallas import tpu as pltpu


# ----------------------------------------------------------------------------
# Generation-aware VMEM budget and tile targets
# ----------------------------------------------------------------------------

def _detect_vmem_capacity():
    try:
        info = pltpu.get_tpu_info()
        for attr in ("vmem_capacity_bytes", "vmem_size_bytes", "vmem_bytes"):
            v = getattr(info, attr, None)
            if v:
                return int(v)
    except Exception:
        pass
    try:
        kind = jax.devices()[0].device_kind.lower()
        if "v7" in kind:
            return 64 * 1024 * 1024
        if "v5" in kind or "v6" in kind:
            return 128 * 1024 * 1024
    except Exception:
        pass
    return 64 * 1024 * 1024            # conservative default, fits every gen


_VMEM_CAP = _detect_vmem_capacity()
_VMEM_LIMIT = int(min((_VMEM_CAP * 3) // 4, 110 * 1024 * 1024))
_BIG_VMEM = _VMEM_CAP >= 100 * 1024 * 1024

_TM_LIN, _TN_LIN, _TK_LIN = 1024, 512, 4096
_TM_XENT = 2048 if _BIG_VMEM else 1024
_TV_XENT = 512
_TM_LN = 1024

# bf16 weight/activation storage (f32 accumulation). Set to jnp.float32 to
# recover reference-exact streaming numerics at ~2x the HBM traffic.
_ACT_DTYPE = jnp.bfloat16


# ----------------------------------------------------------------------------
# Tiling / padding helpers
# ----------------------------------------------------------------------------

def _round_up(x, m):
    return (x + m - 1) // m * m


def _pick_tile(dim, target, mult):
    """Return (tile, padded_dim).

    tile == dim (full, always legal) when dim <= target; otherwise the largest
    `mult`-multiple <= target that divides dim; otherwise `target` with the dim
    padded up to a multiple of it (caller pads with zeros / neutral values)."""
    if dim <= target:
        return dim, dim
    t = (target // mult) * mult
    while t >= mult:
        if dim % t == 0:
            return t, dim
        t -= mult
    return target, _round_up(dim, target)


def _pad_axis(x, axis, new_size, value=0):
    pad = new_size - x.shape[axis]
    if pad <= 0:
        return x
    widths = [(0, 0)] * x.ndim
    widths[axis] = (0, pad)
    return jnp.pad(x, widths, constant_values=value)


# ----------------------------------------------------------------------------
# Tiled linear: matmul + bias [+ gelu] [+ residual] [+ fused LayerNorm]
# K-axis f32 accumulator, bf16 streaming.
# ----------------------------------------------------------------------------

def _linear_kernel(*refs, activation, n_k, has_res, has_ln, ln_eps):
    x_ref, w_ref, b_ref = refs[:3]
    idx = 3
    res_ref = g_ref = beta_ref = None
    if has_res:
        res_ref = refs[idx]
        idx += 1
    if has_ln:
        g_ref, beta_ref = refs[idx], refs[idx + 1]
        idx += 2
    o_ref, acc_ref = refs[idx], refs[idx + 1]

    @pl.when(pl.program_id(2) == 0)
    def _():
        acc_ref[...] = jnp.zeros_like(acc_ref)

    acc_ref[...] += jnp.dot(x_ref[...], w_ref[...],
                            preferred_element_type=jnp.float32)

    @pl.when(pl.program_id(2) == n_k - 1)
    def _():
        y = acc_ref[...] + b_ref[...]          # bias only in finalize
        if activation == "gelu":
            y = jax.nn.gelu(y)
        if has_res:
            y = y + res_ref[...].astype(jnp.float32)   # fused residual
        if has_ln:                                     # fused LayerNorm
            mu = jnp.mean(y, axis=-1, keepdims=True)
            var = jnp.mean((y - mu) ** 2, axis=-1, keepdims=True)
            y = (y - mu) * lax.rsqrt(var + ln_eps) * g_ref[...] + beta_ref[...]
        o_ref[...] = y.astype(o_ref.dtype)


def linear(x, w, b, activation=None, residual=None, ln=None,
           out_dtype=_ACT_DTYPE):
    M, K = x.shape
    N = w.shape[1]
    tm, Mp = _pick_tile(M, _TM_LIN, 128 if M % 128 == 0 else 8)
    tk, Kp = _pick_tile(K, _TK_LIN, 128)
    if ln is not None:
        tn, Np = N, N              # LayerNorm needs the full row in one tile
    else:
        tn, Np = _pick_tile(N, _TN_LIN, 128)
    n_k = Kp // tk

    xp = _pad_axis(_pad_axis(x, 0, Mp), 1, Kp).astype(_ACT_DTYPE)
    wp = _pad_axis(_pad_axis(w, 0, Kp), 1, Np).astype(_ACT_DTYPE)
    bp = _pad_axis(b.reshape(1, N).astype(jnp.float32), 1, Np)

    in_specs = [
        pl.BlockSpec((tm, tk), lambda i, j, k: (i, k)),
        pl.BlockSpec((tk, tn), lambda i, j, k: (k, j)),
        pl.BlockSpec((1, tn), lambda i, j, k: (0, j)),
    ]
    args = [xp, wp, bp]
    if residual is not None:
        rp = _pad_axis(_pad_axis(residual, 0, Mp), 1, Np).astype(_ACT_DTYPE)
        in_specs.append(pl.BlockSpec((tm, tn), lambda i, j, k: (i, j)))
        args.append(rp)
    ln_eps = 0.0
    if ln is not None:
        g, beta, ln_eps = ln
        in_specs.append(pl.BlockSpec((1, N), lambda i, j, k: (0, 0)))
        in_specs.append(pl.BlockSpec((1, N), lambda i, j, k: (0, 0)))
        args.append(g.reshape(1, N).astype(jnp.float32))
        args.append(beta.reshape(1, N).astype(jnp.float32))

    out = pl.pallas_call(
        functools.partial(_linear_kernel, activation=activation, n_k=n_k,
                          has_res=residual is not None,
                          has_ln=ln is not None, ln_eps=ln_eps),
        grid=(Mp // tm, Np // tn, n_k),
        out_shape=jax.ShapeDtypeStruct((Mp, Np), out_dtype),
        in_specs=in_specs,
        out_specs=pl.BlockSpec((tm, tn), lambda i, j, k: (i, j)),
        scratch_shapes=[pltpu.VMEM((tm, tn), jnp.float32)],
        compiler_params=pltpu.CompilerParams(
            dimension_semantics=("parallel", "parallel", "arbitrary"),
            vmem_limit_bytes=_VMEM_LIMIT),
    )(*args)
    if (Mp, Np) != (M, N):
        out = out[:M, :N]
    return out


# ----------------------------------------------------------------------------
# Row-tiled LayerNorm (used only after the embedding gather)
# ----------------------------------------------------------------------------

def _layernorm_kernel(x_ref, g_ref, b_ref, o_ref, *, eps):
    x = x_ref[...].astype(jnp.float32)
    mu = jnp.mean(x, axis=-1, keepdims=True)
    var = jnp.mean((x - mu) ** 2, axis=-1, keepdims=True)
    o_ref[...] = ((x - mu) * lax.rsqrt(var + eps) * g_ref[...]
                  + b_ref[...]).astype(o_ref.dtype)


def layernorm(x, g, b, eps=1e-12):
    M, H = x.shape
    tm, Mp = _pick_tile(M, _TM_LN, 8)
    xp = _pad_axis(x, 0, Mp).astype(_ACT_DTYPE)
    out = pl.pallas_call(
        functools.partial(_layernorm_kernel, eps=eps),
        grid=(Mp // tm,),
        out_shape=jax.ShapeDtypeStruct((Mp, H), _ACT_DTYPE),
        in_specs=[
            pl.BlockSpec((tm, H), lambda i: (i, 0)),
            pl.BlockSpec((1, H), lambda i: (0, 0)),
            pl.BlockSpec((1, H), lambda i: (0, 0)),
        ],
        out_specs=pl.BlockSpec((tm, H), lambda i: (i, 0)),
        compiler_params=pltpu.CompilerParams(
            dimension_semantics=("parallel",),
            vmem_limit_bytes=_VMEM_LIMIT),
    )(xp, g.reshape(1, H).astype(jnp.float32),
      b.reshape(1, H).astype(jnp.float32))
    return out[:M] if Mp != M else out


# ----------------------------------------------------------------------------
# Multi-head attention on the fused (S, 3H) QKV slab
# ----------------------------------------------------------------------------

def _attention_kernel(qkv_ref, m_ref, o_ref, out_sc, *, scale, nh, dh):
    h_dim = nh * dh
    qkv = qkv_ref[0]                            # (S, 3H) bf16 in VMEM
    neg = (1.0 - m_ref[0]) * -1e9               # (1, S) f32 additive mask
    # fold 1/sqrt(dh) into Q once ((S,H) mul) instead of per-head (S,S) scale
    q_all = qkv[:, :h_dim] * scale
    # TODO(synk): pre-permute w_qkv columns / pack head pairs so DH=64 slices
    # start 128-lane aligned; kept simple static head loop here.
    for h in range(nh):                         # static unrolled head loop
        q = q_all[:, h * dh:(h + 1) * dh]
        k = qkv[:, h_dim + h * dh:h_dim + (h + 1) * dh]
        v = qkv[:, 2 * h_dim + h * dh:2 * h_dim + (h + 1) * dh]
        s = lax.dot_general(q, k, (((1,), (1,)), ((), ())),
                            preferred_element_type=jnp.float32) + neg
        s = s - jnp.max(s, axis=-1, keepdims=True)
        p = jnp.exp(s)
        p = p * pl.reciprocal(jnp.sum(p, axis=-1, keepdims=True), approx=True)
        # write into VMEM scratch so each head's registers retire immediately
        out_sc[:, h * dh:(h + 1) * dh] = jnp.dot(
            p.astype(v.dtype), v, preferred_element_type=jnp.float32)
    o_ref[0] = out_sc[...].astype(o_ref.dtype)  # single lane-dense store


def attention(qkv3, mask3, nh, dh, scale):
    B4, S, threeH = qkv3.shape
    H = nh * dh
    return pl.pallas_call(
        functools.partial(_attention_kernel, scale=scale, nh=nh, dh=dh),
        grid=(B4,),
        out_shape=jax.ShapeDtypeStruct((B4, S, H), _ACT_DTYPE),
        in_specs=[
            pl.BlockSpec((1, S, threeH), lambda b: (b, 0, 0)),
            pl.BlockSpec((1, 1, S), lambda b: (b, 0, 0)),
        ],
        out_specs=pl.BlockSpec((1, S, H), lambda b: (b, 0, 0)),
        scratch_shapes=[pltpu.VMEM((S, H), jnp.float32)],
        compiler_params=pltpu.CompilerParams(
            dimension_semantics=("parallel",),
            vmem_limit_bytes=_VMEM_LIMIT),
    )(qkv3.astype(_ACT_DTYPE), mask3)


# ----------------------------------------------------------------------------
# Masked mean pooling (1 sequence per grid step, exact division)
# ----------------------------------------------------------------------------

def _pool_kernel(x_ref, m_ref, o_ref):
    x = x_ref[0].astype(jnp.float32)                                # (S, H)
    m = m_ref[0]                                                    # (1, S)
    summed = jnp.dot(m, x, preferred_element_type=jnp.float32)      # (1, H)
    denom = jnp.maximum(jnp.sum(m, axis=-1, keepdims=True), 1e-9)   # (1, 1)
    o_ref[0] = summed / denom


def masked_mean_pool(x, mask_f):
    R, S, H = x.shape
    out = pl.pallas_call(
        _pool_kernel,
        grid=(R,),
        out_shape=jax.ShapeDtypeStruct((R, 1, H), jnp.float32),
        in_specs=[
            pl.BlockSpec((1, S, H), lambda i: (i, 0, 0)),
            pl.BlockSpec((1, 1, S), lambda i: (i, 0, 0)),
        ],
        out_specs=pl.BlockSpec((1, 1, H), lambda i: (i, 0, 0)),
        compiler_params=pltpu.CompilerParams(
            dimension_semantics=("parallel",),
            vmem_limit_bytes=_VMEM_LIMIT),
    )(x.astype(_ACT_DTYPE), mask_f.reshape(R, 1, S))
    return out[:, 0, :]


# ----------------------------------------------------------------------------
# Fused vocab projection + cross-entropy (online logsumexp over V tiles,
# logits never hit HBM)
# ----------------------------------------------------------------------------

def _vocab_xent_kernel(h_ref, w_ref, b_ref, lbl_ref, o_ref,
                       m_sc, l_sc, p_sc, *, n_v, tv):
    j = pl.program_id(1)

    @pl.when(j == 0)
    def _():
        m_sc[...] = jnp.full_like(m_sc, -jnp.inf)
        l_sc[...] = jnp.zeros_like(l_sc)
        p_sc[...] = jnp.zeros_like(p_sc)

    logits = jnp.dot(h_ref[...], w_ref[...],
                     preferred_element_type=jnp.float32) + b_ref[...]

    blk_max = jnp.max(logits, axis=-1, keepdims=True)
    new_m = jnp.maximum(m_sc[...], blk_max)
    l_sc[...] = (l_sc[...] * jnp.exp(m_sc[...] - new_m)
                 + jnp.sum(jnp.exp(logits - new_m), axis=-1, keepdims=True))
    m_sc[...] = new_m

    cols = j * tv + lax.broadcasted_iota(jnp.int32, logits.shape, 1)
    p_sc[...] += jnp.sum(jnp.where(cols == lbl_ref[...], logits, 0.0),
                         axis=-1, keepdims=True)

    @pl.when(j == n_v - 1)
    def _():
        # per-row (lse - picked); invalid (-100) rows masked out in JAX glue
        o_ref[...] = m_sc[...] + jnp.log(l_sc[...]) - p_sc[...]


def fused_vocab_xent(h, w, b, labels_flat):
    M, H = h.shape
    V = w.shape[1]
    tm, Mp = _pick_tile(M, _TM_XENT, 8)
    tv, Vp = _pick_tile(V, _TV_XENT, 128)
    n_v = Vp // tv

    hp = _pad_axis(h, 0, Mp).astype(_ACT_DTYPE)
    wp = _pad_axis(w, 1, Vp).astype(_ACT_DTYPE)
    # padded vocab columns get a hugely negative bias -> vanish from the lse
    bp = _pad_axis(b.reshape(1, V).astype(jnp.float32), 1, Vp, value=-1e30)
    lbl = _pad_axis(labels_flat.reshape(M, 1).astype(jnp.int32), 0, Mp,
                    value=-100)

    per_row = pl.pallas_call(
        functools.partial(_vocab_xent_kernel, n_v=n_v, tv=tv),
        grid=(Mp // tm, n_v),
        out_shape=jax.ShapeDtypeStruct((Mp, 1), jnp.float32),
        in_specs=[
            pl.BlockSpec((tm, H), lambda i, j: (i, 0)),
            pl.BlockSpec((H, tv), lambda i, j: (0, j)),
            pl.BlockSpec((1, tv), lambda i, j: (0, j)),
            pl.BlockSpec((tm, 1), lambda i, j: (i, 0)),
        ],
        out_specs=pl.BlockSpec((tm, 1), lambda i, j: (i, 0)),
        scratch_shapes=[pltpu.VMEM((tm, 1), jnp.float32)] * 3,
        compiler_params=pltpu.CompilerParams(
            dimension_semantics=("parallel", "arbitrary"),
            vmem_limit_bytes=_VMEM_LIMIT),
    )(hp, wp, bp, lbl)
    return per_row[:M, 0]


# ----------------------------------------------------------------------------
# Bi-encoder head: normalize, scores, response-selection CE, triplet loss
# ----------------------------------------------------------------------------

def _head_kernel(c_ref, p_ref, n_ref,
                 scores_ref, loss_ref, dist_ref, nc_ref, np_ref,
                 *, sim_scale, margin):
    c, p, n = c_ref[...], p_ref[...], n_ref[...]

    def l2norm(x):  # F.normalize(p=2, dim=1, eps=1e-12)
        nrm = jnp.sqrt(jnp.sum(x * x, axis=-1, keepdims=True))
        return x / jnp.maximum(nrm, 1e-12)

    nc, npv, nnv = l2norm(c), l2norm(p), l2norm(n)

    scores = lax.dot_general(nc, npv, (((1,), (1,)), ((), ())),
                             preferred_element_type=jnp.float32) * sim_scale
    scores_ref[...] = scores
    nc_ref[...] = nc
    np_ref[...] = npv

    # CrossEntropyLoss(scores, arange(B))
    m = jnp.max(scores, axis=-1, keepdims=True)
    lse = jnp.log(jnp.sum(jnp.exp(scores - m), axis=-1, keepdims=True)) + m
    rows = lax.broadcasted_iota(jnp.int32, scores.shape, 0)
    cols = lax.broadcasted_iota(jnp.int32, scores.shape, 1)
    diag = (rows == cols).astype(jnp.float32)
    picked = jnp.sum(scores * diag, axis=-1, keepdims=True)
    loss_rs = jnp.mean(lse - picked)

    # squared distances (like the torch module's .pow(2).sum(1))
    dp = jnp.sum((nc - npv) ** 2, axis=-1, keepdims=True)
    dn = jnp.sum((nc - nnv) ** 2, axis=-1, keepdims=True)
    dist_ref[...] = jnp.concatenate([dp, dn], axis=-1)

    # TripletMarginLoss(margin, p=2): pairwise_distance adds eps=1e-6
    dpos = jnp.sqrt(jnp.sum((nc - npv + 1e-6) ** 2, axis=-1, keepdims=True))
    dneg = jnp.sqrt(jnp.sum((nc - nnv + 1e-6) ** 2, axis=-1, keepdims=True))
    loss_tri = jnp.mean(jnp.maximum(dpos - dneg + margin, 0.0))

    loss_ref[...] = jnp.concatenate(
        [loss_rs[None, None], loss_tri[None, None]], axis=1)


def biencoder_head(hid_cont, hid_p, hid_n, sim_scale=20.0, margin=1.0):
    B, H = hid_cont.shape

    def spec(a, b):
        return pl.BlockSpec((a, b), lambda i: (0, 0))

    return pl.pallas_call(
        functools.partial(_head_kernel, sim_scale=sim_scale, margin=margin),
        grid=(1,),
        out_shape=(
            jax.ShapeDtypeStruct((B, B), jnp.float32),   # scores
            jax.ShapeDtypeStruct((1, 2), jnp.float32),   # [loss_rs, loss_tri]
            jax.ShapeDtypeStruct((B, 2), jnp.float32),   # [dist_pos, dist_neg]
            jax.ShapeDtypeStruct((B, H), jnp.float32),   # normalized hid_cont
            jax.ShapeDtypeStruct((B, H), jnp.float32),   # normalized hid_p_resp
        ),
        in_specs=[spec(B, H)] * 3,
        out_specs=(spec(B, B), spec(1, 2), spec(B, 2), spec(B, H), spec(B, H)),
    )(hid_cont, hid_p, hid_n)


# ----------------------------------------------------------------------------
# Synthetic encoder (glue in JAX, compute in the kernels above)
# ----------------------------------------------------------------------------

def init_params(key, H, V, NH, DH, FF, S):
    ks = jax.random.split(key, 10)

    def w(k, shape, std=0.02):
        return (std * jax.random.normal(k, shape, jnp.float32)).astype(_ACT_DTYPE)

    ones = lambda n: jnp.ones((n,), jnp.float32)
    zeros = lambda n: jnp.zeros((n,), jnp.float32)
    return {
        "tok_emb": w(ks[0], (V, H)),
        "pos_emb": w(ks[1], (S, H)),
        "ln_emb_g": ones(H), "ln_emb_b": zeros(H),
        # fused QKV projection
        "w_qkv": w(ks[2], (H, 3 * H)), "b_qkv": zeros(3 * H),
        "wo": w(ks[5], (H, H)), "bo": zeros(H),
        "ln1_g": ones(H), "ln1_b": zeros(H),
        "w1": w(ks[6], (H, FF)), "b1": zeros(FF),
        "w2": w(ks[7], (FF, H)), "b2": zeros(H),
        "ln2_g": ones(H), "ln2_b": zeros(H),
        # MLM head: Linear(H,H) -> LayerNorm(eps=1e-12) -> Linear(H,V)
        "cls_w1": w(ks[8], (H, H)), "cls_b1": zeros(H),
        "cls_ln_g": ones(H), "cls_ln_b": zeros(H),
        "cls_w2": w(ks[9], (H, V)), "cls_b2": zeros(V),
    }


def encoder_forward(params, input_ids, attention_mask, cfg,
                    labels=None, n_mlm=0, pool_start=0):
    """One batched encoder pass over the concatenated (4B, S) ids."""
    B4, S = input_ids.shape
    H, NH, DH = cfg["H"], cfg["NH"], cfg["DH"]
    mask_f = attention_mask.astype(jnp.float32)

    # embedding gather + position embedding (glue, bf16)
    x = params["tok_emb"][input_ids] + params["pos_emb"][None, :S, :]
    x2 = layernorm(x.reshape(B4 * S, H), params["ln_emb_g"], params["ln_emb_b"])

    # fused QKV projection -> per-batch attention on the (S, 3H) slab
    qkv = linear(x2, params["w_qkv"], params["b_qkv"])
    ctx = attention(qkv.reshape(B4, S, 3 * H), mask_f.reshape(B4, 1, S),
                    NH, DH, scale=1.0 / (DH ** 0.5))
    ctx = ctx.reshape(B4 * S, H)

    # output projection with fused residual + fused LayerNorm
    x2 = linear(ctx, params["wo"], params["bo"], residual=x2,
                ln=(params["ln1_g"], params["ln1_b"], 1e-12))

    # FFN (gelu), second matmul with fused residual + fused LayerNorm
    ffn = linear(x2, params["w1"], params["b1"], activation="gelu")
    x2 = linear(ffn, params["w2"], params["b2"], residual=x2,
                ln=(params["ln2_g"], params["ln2_b"], 1e-12))

    loss_mlm = jnp.float32(0.0)
    if labels is not None and n_mlm > 0:
        rows = n_mlm * S
        h = linear(x2[:rows], params["cls_w1"], params["cls_b1"],
                   ln=(params["cls_ln_g"], params["cls_ln_b"], 1e-12))
        labels_flat = labels.reshape(-1)
        per_row = fused_vocab_xent(h, params["cls_w2"], params["cls_b2"],
                                   labels_flat)
        valid = (labels_flat != -100).astype(jnp.float32)
        loss_mlm = jnp.sum(per_row * valid) / jnp.maximum(jnp.sum(valid), 1.0)

    # only pool the rows whose sentence embedding is actually used
    x3 = x2.reshape(B4, S, H)[pool_start:]
    pooled = masked_mean_pool(x3, mask_f[pool_start:])
    return loss_mlm, pooled


def mask_tokens(key, inputs, mlm_probability, vocab_size, mask_id):
    # Deterministic-RNG re-implementation of MLMBiencoder.mask_tokens:
    # special tokens (pad=0, cls=1, sep=2) never masked; 80% -> [MASK],
    # 10% -> random token, 10% -> original.
    k1, k2, k3, k4 = jax.random.split(key, 4)
    special = inputs <= 2
    prob = jnp.where(special, 0.0, mlm_probability)
    masked = jax.random.bernoulli(k1, prob)
    labels = jnp.where(masked, inputs, -100)
    replaced = jax.random.bernoulli(k2, 0.8, inputs.shape) & masked
    out = jnp.where(replaced, mask_id, inputs)
    rand_sel = jax.random.bernoulli(k3, 0.5, inputs.shape) & masked & (~replaced)
    rand_words = jax.random.randint(k4, inputs.shape, 0, vocab_size,
                                    dtype=jnp.int32)
    out = jnp.where(rand_sel, rand_words, out)
    return out, labels


def mlm_biencoder_forward(params, cfg, rng, input_mlm, cont, p_resp, n_resp,
                          p_cluster_label_list, mlm_probability=0.15,
                          sim_scale=20.0, margin=1.0):
    B = cont.shape[0]
    masked_ids, labels = mask_tokens(rng, input_mlm, mlm_probability,
                                     cfg["V"], cfg["mask_id"])

    # Batch the four encoder passes into one (4B, S) pass so every weight is
    # streamed from HBM once and the matmul M is 4x larger.
    all_ids = jnp.concatenate([masked_ids, cont, p_resp, n_resp], axis=0)
    loss_mlm, pooled = encoder_forward(params, all_ids, all_ids > 0, cfg,
                                       labels=labels, n_mlm=B, pool_start=B)

    hid_cont = pooled[:B]
    hid_p_resp = pooled[B:2 * B]
    hid_n_resp = pooled[2 * B:3 * B]

    # TODO(synk): duplicate p_cluster_label handling (resp_label[i] = -100)
    # skipped; the reference code references an undefined `label` there and
    # our cluster labels are unique, so that branch is never taken.
    scores, losses, dists, nhid_cont, nhid_p = biencoder_head(
        hid_cont, hid_p_resp, hid_n_resp, sim_scale=sim_scale, margin=margin)

    loss_rs = losses[0, 0]
    loss_tri = losses[0, 1]
    loss = loss_tri + loss_mlm + loss_rs   # use_triplet_loss and use_rs_loss
    return loss, (loss_mlm, loss_tri, loss_rs, scores,
                  dists[:, 0], dists[:, 1], nhid_cont, nhid_p)


# ----------------------------------------------------------------------------
# Demo
# ----------------------------------------------------------------------------

if __name__ == "__main__":
    B, S, H, V, NH, DH, FF = 2, 8, 32, 64, 2, 16, 64
    cfg = {"H": H, "V": V, "NH": NH, "DH": DH, "mask_id": V - 1}

    key = jax.random.PRNGKey(0)
    kp, kmlm, k1, k2, k3, k4 = jax.random.split(key, 6)
    params = init_params(kp, H, V, NH, DH, FF, S)

    def make_ids(k):
        ids = jax.random.randint(k, (B, S), 3, V - 1, dtype=jnp.int32)
        ids = ids.at[:, 0].set(1)        # CLS
        ids = ids.at[1, S - 2:].set(0)   # pad tail of second sequence
        return ids

    input_mlm = make_ids(k1)
    cont = make_ids(k2)
    p_resp = make_ids(k3)
    n_resp = make_ids(k4)
    p_cluster_label_list = list(range(B))

    loss, aux = mlm_biencoder_forward(params, cfg, kmlm, input_mlm, cont,
                                      p_resp, n_resp, p_cluster_label_list)
    jax.block_until_ready(loss)
    jax.block_until_ready(aux)
    print("KERNEL_OK")
</pallas_src>

<mosaic_0001>
module attributes {stable_mosaic.version = 11 : i64} {
  func.func @_layernorm_kernel(%arg0: i32, %arg1: memref<64x32xbf16, #tpu.memory_space<vmem>>, %arg2: memref<1x32xf32, #tpu.memory_space<vmem>>, %arg3: memref<1x32xf32, #tpu.memory_space<vmem>>, %arg4: memref<64x32xbf16, #tpu.memory_space<vmem>>) attributes {dimension_semantics = [#tpu.dimension_semantics<parallel>], iteration_bounds = array<i64: 1>, scalar_prefetch = 0 : i64, scratch_operands = 0 : i64, tpu.core_type = #tpu.core_type<tc>, window_params = [{transform_indices = @transform_0, window_bounds = array<i64: 64, 32>}, {pipeline_mode = #tpu.pipeline_mode<synchronous>, transform_indices = @transform_1, window_bounds = array<i64: 1, 32>}, {pipeline_mode = #tpu.pipeline_mode<synchronous>, transform_indices = @transform_2, window_bounds = array<i64: 1, 32>}, {transform_indices = @transform_3, window_bounds = array<i64: 64, 32>}]} {
    %c0 = arith.constant 0 : index
    %c0_0 = arith.constant 0 : index
    %0 = vector.load %arg1[%c0, %c0_0] : memref<64x32xbf16, #tpu.memory_space<vmem>>, vector<64x32xbf16>
    %1 = arith.extf %0 : vector<64x32xbf16> to vector<64x32xf32>
    %cst = arith.constant dense<0.000000e+00> : vector<64xf32>
    %2 = vector.multi_reduction <add>, %1, %cst [1] : vector<64x32xf32> to vector<64xf32>
    %3 = vector.shape_cast %2 : vector<64xf32> to vector<64x1xf32>
    %cst_1 = arith.constant 3.200000e+01 : f32
    %4 = vector.broadcast %cst_1 : f32 to vector<64x1xf32>
    %5 = arith.divf %3, %4 : vector<64x1xf32>
    %6 = vector.broadcast %5 : vector<64x1xf32> to vector<64x32xf32>
    %7 = arith.subf %1, %6 : vector<64x32xf32>
    %8 = arith.mulf %7, %7 : vector<64x32xf32>
    %cst_2 = arith.constant dense<0.000000e+00> : vector<64xf32>
    %9 = vector.multi_reduction <add>, %8, %cst_2 [1] : vector<64x32xf32> to vector<64xf32>
    %10 = vector.shape_cast %9 : vector<64xf32> to vector<64x1xf32>
    %cst_3 = arith.constant 3.200000e+01 : f32
    %11 = vector.broadcast %cst_3 : f32 to vector<64x1xf32>
    %12 = arith.divf %10, %11 : vector<64x1xf32>
    %13 = vector.broadcast %5 : vector<64x1xf32> to vector<64x32xf32>
    %14 = arith.subf %1, %13 : vector<64x32xf32>
    %cst_4 = arith.constant 9.99999996E-13 : f32
    %15 = vector.broadcast %cst_4 : f32 to vector<64x1xf32>
    %16 = arith.addf %12, %15 : vector<64x1xf32>
    %17 = math.rsqrt %16 : vector<64x1xf32>
    %18 = vector.broadcast %17 : vector<64x1xf32> to vector<64x32xf32>
    %19 = arith.mulf %14, %18 : vector<64x32xf32>
    %c0_5 = arith.constant 0 : index
    %c0_6 = arith.constant 0 : index
    %20 = vector.load %arg2[%c0_5, %c0_6] : memref<1x32xf32, #tpu.memory_space<vmem>>, vector<1x32xf32>
    %21 = vector.broadcast %20 : vector<1x32xf32> to vector<64x32xf32>
    %22 = arith.mulf %19, %21 : vector<64x32xf32>
    %c0_7 = arith.constant 0 : index
    %c0_8 = arith.constant 0 : index
    %23 = vector.load %arg3[%c0_7, %c0_8] : memref<1x32xf32, #tpu.memory_space<vmem>>, vector<1x32xf32>
    %24 = vector.broadcast %23 : vector<1x32xf32> to vector<64x32xf32>
    %25 = arith.addf %22, %24 : vector<64x32xf32>
    %26 = arith.truncf %25 : vector<64x32xf32> to vector<64x32xbf16>
    %c0_9 = arith.constant 0 : index
    %c0_10 = arith.constant 0 : index
    %27 = vector.load %arg4[%c0_9, %c0_10] : memref<64x32xbf16, #tpu.memory_space<vmem>>, vector<64x32xbf16>
    tpu.vector_store %arg4[%c0_9, %c0_10], %26 {strides = array<i32>} : memref<64x32xbf16, #tpu.memory_space<vmem>>, vector<64x32xbf16>,
    return
  }
  func.func @transform_0(%arg0: i32) -> (i32, i32) {
    %c0_i32 = arith.constant 0 : i32
    %c0_i32_0 = arith.constant 0 : i32
    return %arg0, %c0_i32 : i32, i32
  }
  func.func @transform_1(%arg0: i32) -> (i32, i32) {
    %c0_i32 = arith.constant 0 : i32
    %c0_i32_0 = arith.constant 0 : i32
    %c0_i32_1 = arith.constant 0 : i32
    return %c0_i32, %c0_i32_0 : i32, i32
  }
  func.func @transform_2(%arg0: i32) -> (i32, i32) {
    %c0_i32 = arith.constant 0 : i32
    %c0_i32_0 = arith.constant 0 : i32
    %c0_i32_1 = arith.constant 0 : i32
    return %c0_i32, %c0_i32_0 : i32, i32
  }
  func.func @transform_3(%arg0: i32) -> (i32, i32) {
    %c0_i32 = arith.constant 0 : i32
    %c0_i32_0 = arith.constant 0 : i32
    return %arg0, %c0_i32 : i32, i32
  }
}

</mosaic_0001>

<llo_original>
// kernel: tpu_custom_call.1
$region0: #{tpu_custom_call.1}
  #allocation0 [shape = 'u32[]', space=smem, size = 0x4, offset = 0x4, fixed_abs, tag = 'smem constant byte address 0x4 - core index']
  #allocation1 [shape = 'u32[72,128]{1,0:T(1,128)}', space=vmem, size = 0x9000, scoped, tag = 'internal scratch']
  %s0 = inlined_call_operand.vmem [shape: bf16[64,32], index: 0, kind: input, shape index: {}]
  %s1 = inlined_call_operand.vmem [shape: f32[1,32], index: 1, kind: input, shape index: {}]
  %s2 = inlined_call_operand.vmem [shape: f32[1,32], index: 2, kind: input, shape index: {}]
  %s3 = inlined_call_operand.vmem [shape: bf16[64,32], index: 3, kind: output, shape index: {}]
  %s4 = sld [smem:[#allocation0]]
  $region22: #{tpu_custom_call.1} parent=0
    _
  %s6 = ssub.s32 1, %s4
  %s7 = scalar_select 0, %s6, %s4
  // Predicated region
  $region2: #{tpu_custom_call.1} parent=0 // pred_check
    _
  $region3: #{tpu_custom_call.1} parent=0 // pred_check_branch
    %9 = sbr.rel (0) target = $region5
  $region4: #{tpu_custom_call.1} parent=0 // pred_region
    _
  $region5: #{tpu_custom_call.1} parent=0 // pred_fallthru
    _
  // Predicated region
  $region6: #{tpu_custom_call.1} parent=0 // pred_check
    _
  $region7: #{tpu_custom_call.1} parent=0 // pred_check_branch
    %11 = sbr.rel (0) target = $region9
  $region8: #{tpu_custom_call.1} parent=0 // pred_region
    _
  $region9: #{tpu_custom_call.1} parent=0 // pred_fallthru
    _
  // Predicated region
  $region10: #{tpu_custom_call.1} parent=0 // pred_check
    _
  $region11: #{tpu_custom_call.1} parent=0 // pred_check_branch
    %13 = sbr.rel (0) target = $region13
  $region12: #{tpu_custom_call.1} parent=0 // pred_region
    _
  $region13: #{tpu_custom_call.1} parent=0 // pred_fallthru
    _
  %v14 = vld [vmem:[%s0] sm:$0xf]
  %v15 = vld [vmem:[%s0 + $0x4] sm:$0xf]
  %v16 = vld [vmem:[%s0 + $0x8] sm:$0xf]
  %v17 = vld [vmem:[%s0 + $0xc] sm:$0xf]
  %v18 = vld [vmem:[%s0 + $0x10] sm:$0xf]
  %v19 = vld [vmem:[%s0 + $0x14] sm:$0xf]
  %v20 = vld [vmem:[%s0 + $0x18] sm:$0xf]
  %v21 = vld [vmem:[%s0 + $0x1c] sm:$0xf]
  %v22 = vunpack.c.l.bf16 %v14
  %v23 = vunpack.c.l.bf16 %v15
  %v24 = vunpack.c.l.bf16 %v16
  %v25 = vunpack.c.l.bf16 %v17
  %v26 = vunpack.c.l.bf16 %v18
  %v27 = vunpack.c.l.bf16 %v19
  %v28 = vunpack.c.l.bf16 %v20
  %v29 = vunpack.c.l.bf16 %v21
  %vm30 = vcmask 261120
  %v31 = vsel %vm30, %v22, 0.0
  %32 = vadd.xlane.f32.xlu0 %v31
  %v33 = vpop.xlane.xlu0 %32
  %v34 = vsel %vm30, %v23, 0.0
  %35 = vadd.xlane.f32.xlu0 %v34
  %v36 = vpop.xlane.xlu0 %35
  %v37 = vsel %vm30, %v24, 0.0
  %38 = vadd.xlane.f32.xlu0 %v37
  %v39 = vpop.xlane.xlu0 %38
  %v40 = vsel %vm30, %v25, 0.0
  %41 = vadd.xlane.f32.xlu0 %v40
  %v42 = vpop.xlane.xlu0 %41
  %v43 = vsel %vm30, %v26, 0.0
  %44 = vadd.xlane.f32.xlu0 %v43
  %v45 = vpop.xlane.xlu0 %44
  %v46 = vsel %vm30, %v27, 0.0
  %47 = vadd.xlane.f32.xlu0 %v46
  %v48 = vpop.xlane.xlu0 %47
  %v49 = vsel %vm30, %v28, 0.0
  %50 = vadd.xlane.f32.xlu0 %v49
  %v51 = vpop.xlane.xlu0 %50
  %v52 = vsel %vm30, %v29, 0.0
  %53 = vadd.xlane.f32.xlu0 %v52
  %v54 = vpop.xlane.xlu0 %53
  %v55 = vrcp.pop 32.0
  %v56 = vmul.f32 32.0, %v55
  %v57 = vsub.f32 1.0, %v56
  %v58 = vmul.f32 %v55, %v57
  %v59 = vadd.f32 %v55, %v58
  %vm60 = vweird.f32 %v55
  %v61 = vsel %vm60, %v55, %v59
  %v62 = vmul.f32 %v33, %v61
  %v63 = vmul.f32 %v36, %v61
  %v64 = vmul.f32 %v39, %v61
  %v65 = vmul.f32 %v42, %v61
  %v66 = vmul.f32 %v45, %v61
  %v67 = vmul.f32 %v48, %v61
  %v68 = vmul.f32 %v51, %v61
  %v69 = vmul.f32 %v54, %v61
  %v70 = vsub.f32 %v22, %v62
  %v71 = vsub.f32 %v23, %v63
  %v72 = vsub.f32 %v24, %v64
  %v73 = vsub.f32 %v25, %v65
  %v74 = vsub.f32 %v26, %v66
  %v75 = vsub.f32 %v27, %v67
  %v76 = vsub.f32 %v28, %v68
  %v77 = vsub.f32 %v29, %v69
  %v78 = vmul.f32 %v70, %v70
  %v79 = vmul.f32 %v71, %v71
  %v80 = vmul.f32 %v72, %v72
  %v81 = vmul.f32 %v73, %v73
  %v82 = vmul.f32 %v74, %v74
  %v83 = vmul.f32 %v75, %v75
  %v84 = vmul.f32 %v76, %v76
  %v85 = vmul.f32 %v77, %v77
  %v86 = vsel %vm30, %v78, 0.0
  %87 = vadd.xlane.f32.xlu0 %v86
  %v88 = vpop.xlane.xlu0 %87
  %v89 = vsel %vm30, %v79, 0.0
  %90 = vadd.xlane.f32.xlu0 %v89
  %v91 = vpop.xlane.xlu0 %90
  %v92 = vsel %vm30, %v80, 0.0
  %93 = vadd.xlane.f32.xlu0 %v92
  %v94 = vpop.xlane.xlu0 %93
  %v95 = vsel %vm30, %v81, 0.0
  %96 = vadd.xlane.f32.xlu0 %v95
  %v97 = vpop.xlane.xlu0 %96
  %v98 = vsel %vm30, %v82, 0.0
  %99 = vadd.xlane.f32.xlu0 %v98
  %v100 = vpop.xlane.xlu0 %99
  %v101 = vsel %vm30, %v83, 0.0
  %102 = vadd.xlane.f32.xlu0 %v101
  %v103 = vpop.xlane.xlu0 %102
  %v104 = vsel %vm30, %v84, 0.0
  %105 = vadd.xlane.f32.xlu0 %v104
  %v106 = vpop.xlane.xlu0 %105
  %v107 = vsel %vm30, %v85, 0.0
  %108 = vadd.xlane.f32.xlu0 %v107
  %v109 = vpop.xlane.xlu0 %108
  %v110 = vmul.f32 %v88, %v61
  %v111 = vmul.f32 %v91, %v61
  %v112 = vmul.f32 %v94, %v61
  %v113 = vmul.f32 %v97, %v61
  %v114 = vmul.f32 %v100, %v61
  %v115 = vmul.f32 %v103, %v61
  %v116 = vmul.f32 %v106, %v61
  %v117 = vmul.f32 %v109, %v61
  %v118 = vadd.f32 %v110, 1e-12
  %v119 = vadd.f32 %v111, 1e-12
  %v120 = vadd.f32 %v112, 1e-12
  %v121 = vadd.f32 %v113, 1e-12
  %v122 = vadd.f32 %v114, 1e-12
  %v123 = vadd.f32 %v115, 1e-12
  %v124 = vadd.f32 %v116, 1e-12
  %v125 = vadd.f32 %v117, 1e-12
  %v126 = vrsqrt.pop %v118
  %v127 = vmul.f32 %v126, %v118
  %v128 = vmul.f32 %v127, %v126
  %v129 = vmul.f32 0.5, %v128
  %v130 = vsub.f32 1.5, %v129
  %v131 = vmul.f32 %v126, %v130
  %vm132 = vweird.f32 %v118
  %vm133 = vweird.f32 %v126
  %vm134 = vmor %vm132, %vm133
  %v135 = vsel %vm134, %v126, %v131
  %v136 = vrsqrt.pop %v119
  %v137 = vmul.f32 %v136, %v119
  %v138 = vmul.f32 %v137, %v136
  %v139 = vmul.f32 0.5, %v138
  %v140 = vsub.f32 1.5, %v139
  %v141 = vmul.f32 %v136, %v140
  %vm142 = vweird.f32 %v119
  %vm143 = vweird.f32 %v136
  %vm144 = vmor %vm142, %vm143
  %v145 = vsel %vm144, %v136, %v141
  %v146 = vrsqrt.pop %v120
  %v147 = vmul.f32 %v146, %v120
  %v148 = vmul.f32 %v147, %v146
  %v149 = vmul.f32 0.5, %v148
  %v150 = vsub.f32 1.5, %v149
  %v151 = vmul.f32 %v146, %v150
  %vm152 = vweird.f32 %v120
  %vm153 = vweird.f32 %v146
  %vm154 = vmor %vm152, %vm153
  %v155 = vsel %vm154, %v146, %v151
  %v156 = vrsqrt.pop %v121
  %v157 = vmul.f32 %v156, %v121
  %v158 = vmul.f32 %v157, %v156
  %v159 = vmul.f32 0.5, %v158
  %v160 = vsub.f32 1.5, %v159
  %v161 = vmul.f32 %v156, %v160
  %vm162 = vweird.f32 %v121
  %vm163 = vweird.f32 %v156
  %vm164 = vmor %vm162, %vm163
  %v165 = vsel %vm164, %v156, %v161
  %v166 = vrsqrt.pop %v122
  %v167 = vmul.f32 %v166, %v122
  %v168 = vmul.f32 %v167, %v166
  %v169 = vmul.f32 0.5, %v168
  %v170 = vsub.f32 1.5, %v169
  %v171 = vmul.f32 %v166, %v170
  %vm172 = vweird.f32 %v122
  %vm173 = vweird.f32 %v166
  %vm174 = vmor %vm172, %vm173
  %v175 = vsel %vm174, %v166, %v171
  %v176 = vrsqrt.pop %v123
  %v177 = vmul.f32 %v176, %v123
  %v178 = vmul.f32 %v177, %v176
  %v179 = vmul.f32 0.5, %v178
  %v180 = vsub.f32 1.5, %v179
  %v181 = vmul.f32 %v176, %v180
  %vm182 = vweird.f32 %v123
  %vm183 = vweird.f32 %v176
  %vm184 = vmor %vm182, %vm183
  %v185 = vsel %vm184, %v176, %v181
  %v186 = vrsqrt.pop %v124
  %v187 = vmul.f32 %v186, %v124
  %v188 = vmul.f32 %v187, %v186
  %v189 = vmul.f32 0.5, %v188
  %v190 = vsub.f32 1.5, %v189
  %v191 = vmul.f32 %v186, %v190
  %vm192 = vweird.f32 %v124
  %vm193 = vweird.f32 %v186
  %vm194 = vmor %vm192, %vm193
  %v195 = vsel %vm194, %v186, %v191
  %v196 = vrsqrt.pop %v125
  %v197 = vmul.f32 %v196, %v125
  %v198 = vmul.f32 %v197, %v196
  %v199 = vmul.f32 0.5, %v198
  %v200 = vsub.f32 1.5, %v199
  %v201 = vmul.f32 %v196, %v200
  %vm202 = vweird.f32 %v125
  %vm203 = vweird.f32 %v196
  %vm204 = vmor %vm202, %vm203
  %v205 = vsel %vm204, %v196, %v201
  %v206 = vmul.f32 %v70, %v135
  %v207 = vmul.f32 %v71, %v145
  %v208 = vmul.f32 %v72, %v155
  %v209 = vmul.f32 %v73, %v165
  %v210 = vmul.f32 %v74, %v175
  %v211 = vmul.f32 %v75, %v185
  %v212 = vmul.f32 %v76, %v195
  %v213 = vmul.f32 %v77, %v205
  %v214 = vld [vmem:[%s1] sm:$0x1]
  %v216 = vperm.slane %v214, 0
  %v218 = vmul.f32 %v206, %v216
  %v219 = vmul.f32 %v207, %v216
  %v220 = vmul.f32 %v208, %v216
  %v221 = vmul.f32 %v209, %v216
  %v222 = vmul.f32 %v210, %v216
  %v223 = vmul.f32 %v211, %v216
  %v224 = vmul.f32 %v212, %v216
  %v225 = vmul.f32 %v213, %v216
  %v226 = vld [vmem:[%s2] sm:$0x1]
  %v228 = vperm.slane %v226, 0
  %v230 = vadd.f32 %v218, %v228
  %v231 = vadd.f32 %v219, %v228
  %v232 = vadd.f32 %v220, %v228
  %v233 = vadd.f32 %v221, %v228
  %v234 = vadd.f32 %v222, %v228
  %v235 = vadd.f32 %v223, %v228
  %v236 = vadd.f32 %v224, %v228
  %v237 = vadd.f32 %v225, %v228
  %v238 = vpack.c.bf16 %v230, %v230
  %v239 = vpack.c.bf16 %v231, %v231
  %v240 = vpack.c.bf16 %v232, %v232
  %v241 = vpack.c.bf16 %v233, %v233
  %v242 = vpack.c.bf16 %v234, %v234
  %v243 = vpack.c.bf16 %v235, %v235
  %v244 = vpack.c.bf16 %v236, %v236
  %v245 = vpack.c.bf16 %v237, %v237
  %vm246 = vcmask 257024
  %247 = vst.msk [vmem:[%s3] sm:$0xf] %vm246, %v238
  %248 = vst.msk [vmem:[%s3 + $0x4] sm:$0xf] %vm246, %v239
  %249 = vst.msk [vmem:[%s3 + $0x8] sm:$0xf] %vm246, %v240
  %250 = vst.msk [vmem:[%s3 + $0xc] sm:$0xf] %vm246, %v241
  %251 = vst.msk [vmem:[%s3 + $0x10] sm:$0xf] %vm246, %v242
  %252 = vst.msk [vmem:[%s3 + $0x14] sm:$0xf] %vm246, %v243
  %253 = vst.msk [vmem:[%s3 + $0x18] sm:$0xf] %vm246, %v244
  %254 = vst.msk [vmem:[%s3 + $0x1c] sm:$0xf] %vm246, %v245
  // Predicated region
  $region14: #{tpu_custom_call.1} parent=0 // pred_check
    _
  $region15: #{tpu_custom_call.1} parent=0 // pred_check_branch
    %256 = sbr.rel (0) target = $region17
  $region16: #{tpu_custom_call.1} parent=0 // pred_region
    _
  $region17: #{tpu_custom_call.1} parent=0 // pred_fallthru
    _
  // Predicated region
  $region18: #{tpu_custom_call.1} parent=0 // pred_check
    _
  $region19: #{tpu_custom_call.1} parent=0 // pred_check_branch
    %258 = sbr.rel (0) target = $region21
  $region20: #{tpu_custom_call.1} parent=0 // pred_region
    _
  $region21: #{tpu_custom_call.1} parent=0 // pred_fallthru
    _

</llo_original>
